<compile_context>
chip_gen: v7x
topology: tpu7x:2x2x1
jax: 0.10.0
libtpu: 0.0.40
codegen_flags: <defaults>
</compile_context>

<pallas_src>
import functools

import jax
import jax.numpy as jnp
from jax import lax
from jax.experimental import pallas as pl
from jax.experimental.pallas import tpu as pltpu


_LANE = 128     # lane-width granularity for the last dim
_SUBLANE = 16   # row-tile granularity safe for both f32 (8) and bf16 (16)


def _round_up(x, m):
    return ((x + m - 1) // m) * m


def _choose_tile(total, want, unit):
    """Largest multiple of `unit` <= want that divides `total` (total % unit == 0)."""
    t = max(unit, (min(want, total) // unit) * unit)
    while t > unit and total % t != 0:
        t -= unit
    return t


def _chip_presets():
    """Per-generation tile / VMEM presets (conservative fallback if unknown)."""
    kind = ""
    try:
        kind = jax.devices()[0].device_kind.lower()
    except Exception:
        pass
    if "v7" in kind:
        # 64 MiB VMEM per TC, 2 TCs/chip, ~3.2 TB/s HBM: modest tiles, keep
        # headroom for compiler scratch, and make sure >=2 row tiles exist.
        return dict(tm=512, tp=1024, vmem=48 * 1024 * 1024,
                    budget=36 * 1024 * 1024, split_rows=True)
    if "v6" in kind:
        # 128 MiB VMEM, ~1.4 TB/s HBM, 918 TF/s: big row tiles / resident weights.
        return dict(tm=1024, tp=1024, vmem=100 * 1024 * 1024,
                    budget=88 * 1024 * 1024, split_rows=False)
    if "v5" in kind:
        return dict(tm=512, tp=1024, vmem=96 * 1024 * 1024,
                    budget=80 * 1024 * 1024, split_rows=False)
    # Unknown chip: v7x-safe conservative defaults.
    return dict(tm=512, tp=1024, vmem=48 * 1024 * 1024,
                budget=36 * 1024 * 1024, split_rows=True)


# ----------------------------- kernels ---------------------------------------

def _ffn_kernel_resident(x_ref, w1t_ref, b1_ref, w2_ref, b2_ref, o_ref):
    """Single-pass FFN; W1 (transposed, [P,H]) and W2 ([P,H]) fully VMEM-resident.

    x_ref: (tm, H) native dtype; w1t_ref: (P, H); b1_ref: (1, P) f32;
    w2_ref: (P, H); b2_ref: (1, H) f32; o_ref: (tm, H).
    """
    x = x_ref[...].astype(w1t_ref.dtype)           # cast at the MXU, not in HBM
    # fc_1: x[tm,H] contracted with W1^T[P,H] over H  -> (tm, P), f32 acc.
    h = lax.dot_general(x, w1t_ref[...], (((1,), (1,)), ((), ())),
                        preferred_element_type=jnp.float32)
    h = jnp.maximum(h + b1_ref[...], 0.0)
    # dropout: identity (eval mode).
    out = jnp.dot(h.astype(w2_ref.dtype), w2_ref[...],
                  preferred_element_type=jnp.float32)
    o_ref[...] = (out + b2_ref[...]).astype(o_ref.dtype)


def _ffn_kernel_tiled(x_ref, w1t_ref, b1_ref, w2_ref, b2_ref, o_ref, acc_ref):
    """Tiled-P FFN with f32 accumulator across the P reduction grid axis.

    x_ref: (tm, H); w1t_ref: (tp, H); b1_ref: (1, tp); w2_ref: (tp, H);
    b2_ref: (1, H); o_ref: (tm, H); acc_ref: (tm, H) f32 scratch.
    """
    p = pl.program_id(1)

    @pl.when(p == 0)
    def _init():
        acc_ref[...] = jnp.zeros_like(acc_ref)

    x = x_ref[...].astype(w1t_ref.dtype)
    h = lax.dot_general(x, w1t_ref[...], (((1,), (1,)), ((), ())),
                        preferred_element_type=jnp.float32)
    h = jnp.maximum(h + b1_ref[...], 0.0)
    # dropout: identity (eval mode).
    acc_ref[...] += jnp.dot(h.astype(w2_ref.dtype), w2_ref[...],
                            preferred_element_type=jnp.float32)

    @pl.when(p == pl.num_programs(1) - 1)
    def _finalize():
        o_ref[...] = (acc_ref[...] + b2_ref[...]).astype(o_ref.dtype)


# ----------------------------- wrappers ---------------------------------------

def prepare_ffn_params(w1, b1, w2, b2, *, compute_dtype=jnp.bfloat16):
    """One-time weight preparation (do this OUTSIDE the per-call path).

    w1: [H, P] (fc_1.weight[:, :, 0].T), b1: [P], w2: [P, H], b2: [H].
    Returns (w1t, b1p, w2p, b2p): W1 transposed to [P, H] (contiguous row-slice
    DMAs), everything padded to lane multiples; weights cast to compute_dtype,
    biases kept in f32.  Zero padding is mathematically inert.
    """
    H, P = w1.shape
    H_pad = _round_up(H, _LANE)
    P_pad = _round_up(P, _LANE)
    w1t = jnp.pad(jnp.asarray(w1).T, ((0, P_pad - P), (0, H_pad - H))
                  ).astype(compute_dtype)
    w2p = jnp.pad(jnp.asarray(w2), ((0, P_pad - P), (0, H_pad - H))
                  ).astype(compute_dtype)
    b1p = jnp.pad(jnp.asarray(b1), (0, P_pad - P)).reshape(1, P_pad
                  ).astype(jnp.float32)
    b2p = jnp.pad(jnp.asarray(b2), (0, H_pad - H)).reshape(1, H_pad
                  ).astype(jnp.float32)
    return w1t, b1p, w2p, b2p


@functools.partial(jax.jit,
                   static_argnames=("tm", "tp", "vmem_limit", "resident"))
def _ffn_core(x, w1t, b1, w2, b2, *, tm, tp, vmem_limit, resident):
    B, S, H = x.shape
    M = B * S
    P_pad, H_pad = w1t.shape
    out_dtype = x.dtype
    cd_bytes = jnp.dtype(w1t.dtype).itemsize
    io_bytes = jnp.dtype(out_dtype).itemsize
    M_pad = _round_up(M, tm)

    # x stays in its native dtype; pad only when shapes aren't already aligned.
    x2d = x.reshape(M, H)
    if (M_pad, H_pad) != (M, H):
        x2d = jnp.pad(x2d, ((0, M_pad - M), (0, H_pad - H)))

    grid_m = M_pad // tm

    if resident:
        cost = pl.CostEstimate(
            flops=4 * M_pad * H_pad * P_pad,
            transcendentals=0,
            bytes_accessed=(2 * M_pad * H_pad * io_bytes        # x + out
                            + 2 * P_pad * H_pad * cd_bytes))    # W1 + W2 once
        out2d = pl.pallas_call(
            _ffn_kernel_resident,
            out_shape=jax.ShapeDtypeStruct((M_pad, H_pad), out_dtype),
            grid_spec=pltpu.PrefetchScalarGridSpec(
                num_scalar_prefetch=0,
                grid=(grid_m,),
                in_specs=[
                    pl.BlockSpec((tm, H_pad), lambda i: (i, 0)),       # x tokens
                    pl.BlockSpec((P_pad, H_pad), lambda i: (0, 0)),    # W1^T resident
                    pl.BlockSpec((1, P_pad), lambda i: (0, 0)),        # b1
                    pl.BlockSpec((P_pad, H_pad), lambda i: (0, 0)),    # W2 resident
                    pl.BlockSpec((1, H_pad), lambda i: (0, 0)),        # b2
                ],
                out_specs=pl.BlockSpec((tm, H_pad), lambda i: (i, 0)),
            ),
            compiler_params=pltpu.CompilerParams(
                dimension_semantics=("parallel",),
                vmem_limit_bytes=vmem_limit),
            cost_estimate=cost,
        )(x2d, w1t, b1, w2, b2)
    else:
        grid = (grid_m, P_pad // tp)
        cost = pl.CostEstimate(
            flops=4 * M_pad * H_pad * P_pad,
            transcendentals=0,
            bytes_accessed=(2 * M_pad * H_pad * io_bytes
                            + 2 * grid_m * P_pad * H_pad * cd_bytes))
        out2d = pl.pallas_call(
            _ffn_kernel_tiled,
            out_shape=jax.ShapeDtypeStruct((M_pad, H_pad), out_dtype),
            grid_spec=pltpu.PrefetchScalarGridSpec(
                num_scalar_prefetch=0,
                grid=grid,
                in_specs=[
                    pl.BlockSpec((tm, H_pad), lambda i, p: (i, 0)),    # x tokens
                    pl.BlockSpec((tp, H_pad), lambda i, p: (p, 0)),    # W1^T row slice
                    pl.BlockSpec((1, tp),     lambda i, p: (0, p)),    # b1 slice
                    pl.BlockSpec((tp, H_pad), lambda i, p: (p, 0)),    # W2 row slice
                    pl.BlockSpec((1, H_pad),  lambda i, p: (0, 0)),    # b2
                ],
                out_specs=pl.BlockSpec((tm, H_pad), lambda i, p: (i, 0)),
                scratch_shapes=[pltpu.VMEM((tm, H_pad), jnp.float32)],
            ),
            compiler_params=pltpu.CompilerParams(
                dimension_semantics=("parallel", "arbitrary"),
                vmem_limit_bytes=vmem_limit),
            cost_estimate=cost,
        )(x2d, w1t, b1, w2, b2)

    return out2d[:M, :H].reshape(B, S, H)


def positionwise_feedforward(x, w1, b1, w2, b2, *, tm=None, tp=None,
                             compute_dtype=jnp.bfloat16, force_tiled=False,
                             prepared=None):
    """x: [B, S, H] -> [B, S, H].  w1: [H, P], b1: [P], w2: [P, H], b2: [H].

    compute_dtype: MXU operand dtype (default bf16; accumulation / bias / ReLU
    stay f32, so this is the numerics contract vs. the f32 PyTorch reference).
    Pass `prepared=prepare_ffn_params(...)` to reuse padded/cast weights across
    calls and avoid the per-call weight prep pass.
    """
    if prepared is None:
        prepared = prepare_ffn_params(w1, b1, w2, b2, compute_dtype=compute_dtype)
    w1t, b1p, w2p, b2p = prepared

    B, S, H = x.shape
    M = B * S
    P_pad, H_pad = w1t.shape
    preset = _chip_presets()
    if tm is None:
        tm = preset["tm"]
    if tp is None:
        tp = preset["tp"]

    # Row tile: multiple of the sublane unit, no larger than padded M.
    tm_eff = max(_SUBLANE,
                 (min(tm, _round_up(M, _SUBLANE)) // _SUBLANE) * _SUBLANE)
    if preset["split_rows"]:
        # v7x: keep >= 2 row tiles so both TensorCores get work when M is small.
        half_rows = _round_up(max((M + 1) // 2, _SUBLANE), _SUBLANE)
        tm_eff = min(tm_eff, half_rows)

    cd_bytes = jnp.dtype(w1t.dtype).itemsize
    x_bytes = jnp.dtype(x.dtype).itemsize

    # Conservative VMEM working-set estimate for the weight-resident kernel
    # (double-buffered x/out/weights + f32 and cast copies of the h intermediate).
    resident_bytes = (2 * 2 * P_pad * H_pad * cd_bytes
                      + 2 * 2 * tm_eff * H_pad * x_bytes
                      + tm_eff * P_pad * (4 + cd_bytes)
                      + tm_eff * H_pad * 4
                      + 2 * (P_pad + H_pad) * 4)
    resident = (not force_tiled) and (resident_bytes <= preset["budget"])

    tp_eff = P_pad if resident else _choose_tile(P_pad, tp, _LANE)

    return _ffn_core(x, w1t, b1p, w2p, b2p,
                     tm=tm_eff, tp=tp_eff,
                     vmem_limit=preset["vmem"], resident=resident)


# ----------------------------- reference / demo -------------------------------

def _reference(x, w1, b1, w2, b2):
    return jnp.maximum(x @ w1 + b1, 0.0) @ w2 + b2


def _init_params(key, hid_dim, pf_dim, dtype=jnp.float32):
    """Deterministic init matching Conv1d parameter shapes.

    PyTorch Conv1d(hid, pf, 1).weight is [pf, hid, 1]; we store its transpose
    squeezed to [hid, pf] so the math is x @ W1 directly.
    """
    k1, k2, k3, k4 = jax.random.split(key, 4)
    s1 = 1.0 / jnp.sqrt(hid_dim)
    s2 = 1.0 / jnp.sqrt(pf_dim)
    w1 = jax.random.uniform(k1, (hid_dim, pf_dim), dtype, -s1, s1)   # fc_1.weight^T
    b1 = jax.random.uniform(k2, (pf_dim,), dtype, -s1, s1)           # fc_1.bias
    w2 = jax.random.uniform(k3, (pf_dim, hid_dim), dtype, -s2, s2)   # fc_2.weight^T
    b2 = jax.random.uniform(k4, (hid_dim,), dtype, -s2, s2)          # fc_2.bias
    return w1, b1, w2, b2


if __name__ == "__main__":
    key = jax.random.PRNGKey(0)
    kx, kp, kx2, kp2 = jax.random.split(key, 4)

    # Small demo consistent with the module: batch=2, seq=8, hid=32, pf=64.
    B, S, HID, PF = 2, 8, 32, 64
    x = jax.random.normal(kx, (B, S, HID), jnp.float32)
    w1, b1, w2, b2 = _init_params(kp, HID, PF)
    ref = _reference(x, w1, b1, w2, b2)

    # 1) exact f32 MXU path (tight tolerance), weight-resident single pass.
    out_f32 = jax.block_until_ready(
        positionwise_feedforward(x, w1, b1, w2, b2, compute_dtype=jnp.float32))
    assert out_f32.shape == (B, S, HID)
    assert jnp.allclose(out_f32, ref, atol=1e-4, rtol=1e-4), "f32 mismatch"

    # 2) default bf16-at-the-MXU path, weights prepared once and reused.
    prep = prepare_ffn_params(w1, b1, w2, b2, compute_dtype=jnp.bfloat16)
    out_bf16 = jax.block_until_ready(
        positionwise_feedforward(x, w1, b1, w2, b2, prepared=prep))
    _ = jax.block_until_ready(
        positionwise_feedforward(x, w1, b1, w2, b2, prepared=prep))
    assert out_bf16.shape == (B, S, HID)
    assert float(jnp.max(jnp.abs(out_bf16 - ref))) < 1e-1, "bf16 mismatch"

    # 3) forced tiled-P reduction path (multi-step grid on both axes,
    #    exercises the f32 accumulator + pl.when init/finalize).
    B2, S2, HID2, PF2 = 2, 40, 32, 256
    x2 = jax.random.normal(kx2, (B2, S2, HID2), jnp.float32)
    params2 = _init_params(kp2, HID2, PF2)
    out2 = jax.block_until_ready(
        positionwise_feedforward(x2, *params2, tm=16, tp=128,
                                 compute_dtype=jnp.float32, force_tiled=True))
    ref2 = _reference(x2, *params2)
    assert jnp.allclose(out2, ref2, atol=1e-4, rtol=1e-4), "tiled mismatch"

    print("KERNEL_OK")
</pallas_src>

<mosaic_0001>
module attributes {stable_mosaic.version = 11 : i64} {
  func.func @_ffn_kernel_resident(%arg0: i32, %arg1: memref<16x128xf32, #tpu.memory_space<vmem>>, %arg2: memref<128x128xf32, #tpu.memory_space<vmem>>, %arg3: memref<1x128xf32, #tpu.memory_space<vmem>>, %arg4: memref<128x128xf32, #tpu.memory_space<vmem>>, %arg5: memref<1x128xf32, #tpu.memory_space<vmem>>, %arg6: memref<16x128xf32, #tpu.memory_space<vmem>>) attributes {dimension_semantics = [#tpu.dimension_semantics<parallel>], iteration_bounds = array<i64: 1>, scalar_prefetch = 0 : i64, scratch_operands = 0 : i64, tpu.core_type = #tpu.core_type<tc>, window_params = [{transform_indices = @transform_0, window_bounds = array<i64: 16, 128>}, {pipeline_mode = #tpu.pipeline_mode<synchronous>, transform_indices = @transform_1, window_bounds = array<i64: 128, 128>}, {pipeline_mode = #tpu.pipeline_mode<synchronous>, transform_indices = @transform_2, window_bounds = array<i64: 1, 128>}, {pipeline_mode = #tpu.pipeline_mode<synchronous>, transform_indices = @transform_3, window_bounds = array<i64: 128, 128>}, {pipeline_mode = #tpu.pipeline_mode<synchronous>, transform_indices = @transform_4, window_bounds = array<i64: 1, 128>}, {transform_indices = @transform_5, window_bounds = array<i64: 16, 128>}]} {
    %c0 = arith.constant 0 : index
    %c0_0 = arith.constant 0 : index
    %0 = vector.load %arg1[%c0, %c0_0] : memref<16x128xf32, #tpu.memory_space<vmem>>, vector<16x128xf32>
    %c0_1 = arith.constant 0 : index
    %c0_2 = arith.constant 0 : index
    %1 = vector.load %arg2[%c0_1, %c0_2] : memref<128x128xf32, #tpu.memory_space<vmem>>, vector<128x128xf32>
    %cst = arith.constant dense<0.000000e+00> : vector<16x128xf32>
    %2 = tpu.matmul %0, %1, %cst {dimension_numbers = #tpu.dot_dimension_numbers<[1], [1], [0], [0], [0, 0, 1, 0], [], []>} : vector<16x128xf32>, vector<128x128xf32>, vector<16x128xf32> -> vector<16x128xf32>
    %c0_3 = arith.constant 0 : index
    %c0_4 = arith.constant 0 : index
    %3 = vector.load %arg3[%c0_3, %c0_4] : memref<1x128xf32, #tpu.memory_space<vmem>>, vector<1x128xf32>
    %4 = vector.broadcast %3 : vector<1x128xf32> to vector<16x128xf32>
    %5 = arith.addf %2, %4 : vector<16x128xf32>
    %cst_5 = arith.constant 0.000000e+00 : f32
    %6 = vector.broadcast %cst_5 : f32 to vector<16x128xf32>
    %7 = arith.maximumf %5, %6 : vector<16x128xf32>
    %c0_6 = arith.constant 0 : index
    %c0_7 = arith.constant 0 : index
    %8 = vector.load %arg4[%c0_6, %c0_7] : memref<128x128xf32, #tpu.memory_space<vmem>>, vector<128x128xf32>
    %cst_8 = arith.constant dense<0.000000e+00> : vector<16x128xf32>
    %9 = tpu.matmul %7, %8, %cst_8 {dimension_numbers = #tpu.dot_dimension_numbers<[1], [0], [0], [1], [0, 0, 1, 1], [], []>} : vector<16x128xf32>, vector<128x128xf32>, vector<16x128xf32> -> vector<16x128xf32>
    %c0_9 = arith.constant 0 : index
    %c0_10 = arith.constant 0 : index
    %10 = vector.load %arg5[%c0_9, %c0_10] : memref<1x128xf32, #tpu.memory_space<vmem>>, vector<1x128xf32>
    %11 = vector.broadcast %10 : vector<1x128xf32> to vector<16x128xf32>
    %12 = arith.addf %9, %11 : vector<16x128xf32>
    %c0_11 = arith.constant 0 : index
    %c0_12 = arith.constant 0 : index
    %13 = vector.load %arg6[%c0_11, %c0_12] : memref<16x128xf32, #tpu.memory_space<vmem>>, vector<16x128xf32>
    tpu.vector_store %arg6[%c0_11, %c0_12], %12 {strides = array<i32>} : memref<16x128xf32, #tpu.memory_space<vmem>>, vector<16x128xf32>,
    return
  }
  func.func @transform_0(%arg0: i32) -> (i32, i32) {
    %c0_i32 = arith.constant 0 : i32
    %c0_i32_0 = arith.constant 0 : i32
    return %arg0, %c0_i32 : i32, i32
  }
  func.func @transform_1(%arg0: i32) -> (i32, i32) {
    %c0_i32 = arith.constant 0 : i32
    %c0_i32_0 = arith.constant 0 : i32
    %c0_i32_1 = arith.constant 0 : i32
    return %c0_i32, %c0_i32_0 : i32, i32
  }
  func.func @transform_2(%arg0: i32) -> (i32, i32) {
    %c0_i32 = arith.constant 0 : i32
    %c0_i32_0 = arith.constant 0 : i32
    %c0_i32_1 = arith.constant 0 : i32
    return %c0_i32, %c0_i32_0 : i32, i32
  }
  func.func @transform_3(%arg0: i32) -> (i32, i32) {
    %c0_i32 = arith.constant 0 : i32
    %c0_i32_0 = arith.constant 0 : i32
    %c0_i32_1 = arith.constant 0 : i32
    return %c0_i32, %c0_i32_0 : i32, i32
  }
  func.func @transform_4(%arg0: i32) -> (i32, i32) {
    %c0_i32 = arith.constant 0 : i32
    %c0_i32_0 = arith.constant 0 : i32
    %c0_i32_1 = arith.constant 0 : i32
    return %c0_i32, %c0_i32_0 : i32, i32
  }
  func.func @transform_5(%arg0: i32) -> (i32, i32) {
    %c0_i32 = arith.constant 0 : i32
    %c0_i32_0 = arith.constant 0 : i32
    return %arg0, %c0_i32 : i32, i32
  }
}

</mosaic_0001>

<llo_original>
// kernel: _ffn_core.1
$region0: #{_ffn_core.1}
  #allocation0 [shape = 'u32[]', space=smem, size = 0x4, offset = 0x4, fixed_abs, tag = 'smem constant byte address 0x4 - core index']
  #allocation1 [shape = 'u32[144,128]{1,0:T(1,128)}', space=vmem, size = 0x12000, scoped, tag = 'internal scratch']
  %s0 = inlined_call_operand.vmem [shape: f32[16,128], index: 0, kind: input, shape index: {}]
  %s1 = inlined_call_operand.hbm [shape: f32[128,128], index: 1, kind: input, shape index: {}]
  %s2 = inlined_call_operand.vmem [shape: f32[1,128], index: 2, kind: input, shape index: {}]
  %s3 = inlined_call_operand.hbm [shape: f32[128,128], index: 3, kind: input, shape index: {}]
  %s4 = inlined_call_operand.vmem [shape: f32[1,128], index: 4, kind: input, shape index: {}]
  %s5 = inlined_call_operand.vmem [shape: f32[16,128], index: 5, kind: output, shape index: {}]
  %s6 = sld [smem:[#allocation0]]
  $region38: #{_ffn_core.1} parent=0
    _
  %s8 = ssub.s32 1, %s6
  %s9 = scalar_select 0, %s8, %s6
  $region1: #{_ffn_core.1} parent=0
    #allocation2 [shape = 'u8[65536]{0}', space=vmem, size = 0x10000, scoped, tag = 'input window, operand 1, single buffered']
    #allocation3 [shape = 's32[1]{0}', space=sflag, size = 0x4, scoped, tag = 'scoped memory for _ffn_core.1']
    #allocation4 [shape = 'u8[65536]{0}', space=vmem, size = 0x10000, scoped, tag = 'input window, operand 3, single buffered']
    #allocation5 [shape = 's32[1]{0}', space=sflag, size = 0x4, scoped, tag = 'scoped memory for _ffn_core.1']
    %10 = vsyncpa [#allocation3], 0
    %11 = vsyncpa [#allocation5], 0
    // Predicated region
    $region2: #{_ffn_core.1} parent=1 // pred_check
      _
    $region3: #{_ffn_core.1} parent=1 // pred_check_branch
      %13 = sbr.rel (0) target = $region5
    $region4: #{_ffn_core.1} parent=1 // pred_region
      _
    $region5: #{_ffn_core.1} parent=1 // pred_fallthru
      _
    // Predicated region
    $region6: #{_ffn_core.1} parent=1 // pred_check
      _
    $region7: #{_ffn_core.1} parent=1 // pred_check_branch
      %15 = sbr.rel (0) target = $region9
    $region8: #{_ffn_core.1} parent=1 // pred_region
      %s17 = ssub.s32 2048, 2048
      %18 = vsyncadd [#allocation3], %s17
      %s19 = sshll.u32 [#allocation2], 4
      %s20 = int_to_ptr.vmem [resolvable:$true] %s19
      %25 = dma.hbm_to_vmem [thread:$0]  %s1, 2048, %s20, [#allocation3], 128, 128, 8
    $region9: #{_ffn_core.1} parent=1 // pred_fallthru
      _
    // Predicated region
    $region10: #{_ffn_core.1} parent=1 // pred_check
      _
    $region11: #{_ffn_core.1} parent=1 // pred_check_branch
      %27 = sbr.rel (0) target = $region13
    $region12: #{_ffn_core.1} parent=1 // pred_region
      _
    $region13: #{_ffn_core.1} parent=1 // pred_fallthru
      _
    // Predicated region
    $region14: #{_ffn_core.1} parent=1 // pred_check
      _
    $region15: #{_ffn_core.1} parent=1 // pred_check_branch
      %29 = sbr.rel (0) target = $region17
    $region16: #{_ffn_core.1} parent=1 // pred_region
      %s31 = ssub.s32 2048, 2048
      %32 = vsyncadd [#allocation5], %s31
      %s33 = sshll.u32 [#allocation4], 4
      %s34 = int_to_ptr.vmem [resolvable:$true] %s33
      %39 = dma.hbm_to_vmem [thread:$0]  %s3, 2048, %s34, [#allocation5], 128, 128, 8
    $region17: #{_ffn_core.1} parent=1 // pred_fallthru
      _
    // Predicated region
    $region18: #{_ffn_core.1} parent=1 // pred_check
      _
    $region19: #{_ffn_core.1} parent=1 // pred_check_branch
      %41 = sbr.rel (0) target = $region21
    $region20: #{_ffn_core.1} parent=1 // pred_region
      _
    $region21: #{_ffn_core.1} parent=1 // pred_fallthru
      _
    // Predicated region
    $region22: #{_ffn_core.1} parent=1 // pred_check
      _
    $region23: #{_ffn_core.1} parent=1 // pred_check_branch
      %43 = sbr.rel (0) target = $region25
    $region24: #{_ffn_core.1} parent=1 // pred_region
      %44 = dma.done [#allocation3], 2048
    $region25: #{_ffn_core.1} parent=1 // pred_fallthru
      _
    // Predicated region
    $region26: #{_ffn_core.1} parent=1 // pred_check
      _
    $region27: #{_ffn_core.1} parent=1 // pred_check_branch
      %46 = sbr.rel (0) target = $region29
    $region28: #{_ffn_core.1} parent=1 // pred_region
      %47 = dma.done [#allocation5], 2048
    $region29: #{_ffn_core.1} parent=1 // pred_fallthru
      _
    %v48 = vld [vmem:[%s0] sm:$0xff]
    %v49 = vld [vmem:[%s0 + $0x8] sm:$0xff]
    %v50 = vld [vmem:[#allocation2] sm:$0xff]
    %v51 = vld [vmem:[#allocation2 + $0x8] sm:$0xff]
    %v52 = vld [vmem:[#allocation2 + $0x10] sm:$0xff]
    %v53 = vld [vmem:[#allocation2 + $0x18] sm:$0xff]
    %v54 = vld [vmem:[#allocation2 + $0x20] sm:$0xff]
    %v55 = vld [vmem:[#allocation2 + $0x28] sm:$0xff]
    %v56 = vld [vmem:[#allocation2 + $0x30] sm:$0xff]
    %v57 = vld [vmem:[#allocation2 + $0x38] sm:$0xff]
    %v58 = vld [vmem:[#allocation2 + $0x40] sm:$0xff]
    %v59 = vld [vmem:[#allocation2 + $0x48] sm:$0xff]
    %v60 = vld [vmem:[#allocation2 + $0x50] sm:$0xff]
    %v61 = vld [vmem:[#allocation2 + $0x58] sm:$0xff]
    %v62 = vld [vmem:[#allocation2 + $0x60] sm:$0xff]
    %v63 = vld [vmem:[#allocation2 + $0x68] sm:$0xff]
    %v64 = vld [vmem:[#allocation2 + $0x70] sm:$0xff]
    %v65 = vld [vmem:[#allocation2 + $0x78] sm:$0xff]
    %v66 = vld [vmem:[%s2] sm:$0x1]
    %v68 = vlaneseq
    %v69 = vshrl.u32 %v68, 7
    %v70 = vsub.s32 0, %v69
    %v71 = vrot.slane %v66, %v70
    %73 = vmatprep.subr.mxu0 0.0
    %74 = vmatpush1.xpose.msra.mxu0 %v50
    %75 = vmatprep.subr.mxu0 0.0
    %76 = vmatpush1.xpose.msra.mxu0 %v51
    %77 = vmatprep.subr.mxu0 0.0
    %78 = vmatpush1.xpose.msra.mxu0 %v52
    %79 = vmatprep.subr.mxu0 0.0
    %80 = vmatpush1.xpose.msra.mxu0 %v53
    %81 = vmatprep.subr.mxu0 0.0
    %82 = vmatpush1.xpose.msra.mxu0 %v54
    %83 = vmatprep.subr.mxu0 0.0
    %84 = vmatpush1.xpose.msra.mxu0 %v55
    %85 = vmatprep.subr.mxu0 0.0
    %86 = vmatpush1.xpose.msra.mxu0 %v56
    %87 = vmatprep.subr.mxu0 0.0
    %88 = vmatpush1.xpose.msra.mxu0 %v57
    %89 = vmatprep.subr.mxu0 0.0
    %90 = vmatpush1.xpose.msra.mxu0 %v58
    %91 = vmatprep.subr.mxu0 0.0
    %92 = vmatpush1.xpose.msra.mxu0 %v59
    %93 = vmatprep.subr.mxu0 0.0
    %94 = vmatpush1.xpose.msra.mxu0 %v60
    %95 = vmatprep.subr.mxu0 0.0
    %96 = vmatpush1.xpose.msra.mxu0 %v61
    %97 = vmatprep.subr.mxu0 0.0
    %98 = vmatpush1.xpose.msra.mxu0 %v62
    %99 = vmatprep.subr.mxu0 0.0
    %100 = vmatpush1.xpose.msra.mxu0 %v63
    %101 = vmatprep.subr.mxu0 0.0
    %102 = vmatpush1.xpose.msra.mxu0 %v64
    %103 = vmatprep.subr.mxu0 0.0
    %104 = vmatpush1.xpose.msra.mxu0 %v65
    %105 = vmatprep.subr.mxu0 0.0
    %106 = vmatpush1.xpose.msra.mxu0 0.0
    %107 = vmatprep.subr.mxu0 0.0
    %108 = vmatpush1.xpose.msra.mxu0 0.0
    %109 = vmatprep.subr.mxu0 0.0
    %110 = vmatpush1.xpose.msra.mxu0 0.0
    %111 = vmatprep.subr.mxu0 0.0
    %112 = vmatpush1.xpose.msra.mxu0 0.0
    %113 = vmatprep.subr.mxu0 0.0
    %114 = vmatpush1.xpose.msra.mxu0 0.0
    %115 = vmatprep.subr.mxu0 0.0
    %116 = vmatpush1.xpose.msra.mxu0 0.0
    %117 = vmatprep.subr.mxu0 0.0
    %118 = vmatpush1.xpose.msra.mxu0 0.0
    %119 = vmatprep.subr.mxu0 0.0
    %120 = vmatpush1.xpose.msra.mxu0 0.0
    %121 = vmatprep.subr.mxu0 0.0
    %122 = vmatpush1.xpose.msra.mxu0 0.0
    %123 = vmatprep.subr.mxu0 0.0
    %124 = vmatpush1.xpose.msra.mxu0 0.0
    %125 = vmatprep.subr.mxu0 0.0
    %126 = vmatpush1.xpose.msra.mxu0 0.0
    %127 = vmatprep.subr.mxu0 0.0
    %128 = vmatpush1.xpose.msra.mxu0 0.0
    %129 = vmatprep.subr.mxu0 0.0
    %130 = vmatpush1.xpose.msra.mxu0 0.0
    %131 = vmatprep.subr.mxu0 0.0
    %132 = vmatpush1.xpose.msra.mxu0 0.0
    %133 = vmatprep.subr.mxu0 0.0
    %134 = vmatpush1.xpose.msra.mxu0 0.0
    %135 = vmatprep.subr.mxu0 0.0
    %136 = vmatpush1.xpose.msra.mxu0 0.0
    %137 = vmatprep.mubr.f32.mxu0 0.0
    %138 = vmatmul.mubr.f32.gmra.mrb[0].mxu0 %v48
    %v139 = vpop.f32.mrb[0].mxu0
    %v140 = vadd.f32 %v71, %v139
    %v141 = vpop.f32.mrb[0].mxu0
    %142 = vmatprep.mubr.f32.mxu0 0.0
    %143 = vmatmul.mubr.f32.gmra.mrb[0].mxu0 %v49
    %v144 = vpop.f32.mrb[0].mxu0
    %v145 = vadd.f32 %v71, %v144
    %v146 = vpop.f32.mrb[0].mxu0
    %147 = vdwg.mxu0
    %v148 = vmax.f32 %v140, 0.0
    %v149 = vmax.f32 %v145, 0.0
    %v150 = vld [vmem:[#allocation4] sm:$0xff]
    %v151 = vld [vmem:[#allocation4 + $0x8] sm:$0xff]
    %v152 = vld [vmem:[#allocation4 + $0x10] sm:$0xff]
    %v153 = vld [vmem:[#allocation4 + $0x18] sm:$0xff]
    %v154 = vld [vmem:[#allocation4 + $0x20] sm:$0xff]
    %v155 = vld [vmem:[#allocation4 + $0x28] sm:$0xff]
    %v156 = vld [vmem:[#allocation4 + $0x30] sm:$0xff]
    %v157 = vld [vmem:[#allocation4 + $0x38] sm:$0xff]
    %v158 = vld [vmem:[#allocation4 + $0x40] sm:$0xff]
    %v159 = vld [vmem:[#allocation4 + $0x48] sm:$0xff]
    %v160 = vld [vmem:[#allocation4 + $0x50] sm:$0xff]
    %v161 = vld [vmem:[#allocation4 + $0x58] sm:$0xff]
    %v162 = vld [vmem:[#allocation4 + $0x60] sm:$0xff]
    %v163 = vld [vmem:[#allocation4 + $0x68] sm:$0xff]
    %v164 = vld [vmem:[#allocation4 + $0x70] sm:$0xff]
    %v165 = vld [vmem:[#allocation4 + $0x78] sm:$0xff]
    %v166 = vld [vmem:[%s4] sm:$0x1]
    %v168 = vlaneseq
    %v169 = vshrl.u32 %v168, 7
    %v170 = vsub.s32 0, %v169
    %v171 = vrot.slane %v166, %v170
    %173 = vmatprep.subr.mxu0 0.0
    %174 = vmatpush1.msra.mxu0 %v150
    %175 = vmatprep.subr.mxu0 0.0
    %176 = vmatpush1.msra.mxu0 %v151
    %177 = vmatprep.subr.mxu0 0.0
    %178 = vmatpush1.msra.mxu0 %v152
    %179 = vmatprep.subr.mxu0 0.0
    %180 = vmatpush1.msra.mxu0 %v153
    %181 = vmatprep.subr.mxu0 0.0
    %182 = vmatpush1.msra.mxu0 %v154
    %183 = vmatprep.subr.mxu0 0.0
    %184 = vmatpush1.msra.mxu0 %v155
    %185 = vmatprep.subr.mxu0 0.0
    %186 = vmatpush1.msra.mxu0 %v156
    %187 = vmatprep.subr.mxu0 0.0
    %188 = vmatpush1.msra.mxu0 %v157
    %189 = vmatprep.subr.mxu0 0.0
    %190 = vmatpush1.msra.mxu0 %v158
    %191 = vmatprep.subr.mxu0 0.0
    %192 = vmatpush1.msra.mxu0 %v159
    %193 = vmatprep.subr.mxu0 0.0
    %194 = vmatpush1.msra.mxu0 %v160
    %195 = vmatprep.subr.mxu0 0.0
    %196 = vmatpush1.msra.mxu0 %v161
    %197 = vmatprep.subr.mxu0 0.0
    %198 = vmatpush1.msra.mxu0 %v162
    %199 = vmatprep.subr.mxu0 0.0
    %200 = vmatpush1.msra.mxu0 %v163
    %201 = vmatprep.subr.mxu0 0.0
    %202 = vmatpush1.msra.mxu0 %v164
    %203 = vmatprep.subr.mxu0 0.0
    %204 = vmatpush1.msra.mxu0 %v165
    %205 = vmatprep.subr.mxu0 0.0
    %206 = vmatpush1.msra.mxu0 0.0
    %207 = vmatprep.subr.mxu0 0.0
    %208 = vmatpush1.msra.mxu0 0.0
    %209 = vmatprep.subr.mxu0 0.0
    %210 = vmatpush1.msra.mxu0 0.0
    %211 = vmatprep.subr.mxu0 0.0
    %212 = vmatpush1.msra.mxu0 0.0
    %213 = vmatprep.subr.mxu0 0.0
    %214 = vmatpush1.msra.mxu0 0.0
    %215 = vmatprep.subr.mxu0 0.0
    %216 = vmatpush1.msra.mxu0 0.0
    %217 = vmatprep.subr.mxu0 0.0
    %218 = vmatpush1.msra.mxu0 0.0
    %219 = vmatprep.subr.mxu0 0.0
    %220 = vmatpush1.msra.mxu0 0.0
    %221 = vmatprep.subr.mxu0 0.0
    %222 = vmatpush1.msra.mxu0 0.0
    %223 = vmatprep.subr.mxu0 0.0
    %224 = vmatpush1.msra.mxu0 0.0
    %225 = vmatprep.subr.mxu0 0.0
    %226 = vmatpush1.msra.mxu0 0.0
    %227 = vmatprep.subr.mxu0 0.0
    %228 = vmatpush1.msra.mxu0 0.0
    %229 = vmatprep.subr.mxu0 0.0
    %230 = vmatpush1.msra.mxu0 0.0
    %231 = vmatprep.subr.mxu0 0.0
    %232 = vmatpush1.msra.mxu0 0.0
    %233 = vmatprep.subr.mxu0 0.0
    %234 = vmatpush1.msra.mxu0 0.0
    %235 = vmatprep.subr.mxu0 0.0
    %236 = vmatpush1.msra.mxu0 0.0
    %237 = vmatprep.mubr.f32.mxu0 0.0
    %238 = vmatmul.mubr.f32.gmra.mrb[0].mxu0 %v148
    %v239 = vpop.f32.mrb[0].mxu0
    %v240 = vadd.f32 %v171, %v239
    %v241 = vpop.f32.mrb[0].mxu0
    %242 = vmatprep.mubr.f32.mxu0 0.0
    %243 = vmatmul.mubr.f32.gmra.mrb[0].mxu0 %v149
    %v244 = vpop.f32.mrb[0].mxu0
    %v245 = vadd.f32 %v171, %v244
    %v246 = vpop.f32.mrb[0].mxu0
    %247 = vdwg.mxu0
    %248 = vst [vmem:[%s5] sm:$0xff] %v240
    %249 = vst [vmem:[%s5 + $0x8] sm:$0xff] %v245
    // Predicated region
    $region30: #{_ffn_core.1} parent=1 // pred_check
      _
    $region31: #{_ffn_core.1} parent=1 // pred_check_branch
      %251 = sbr.rel (0) target = $region33
    $region32: #{_ffn_core.1} parent=1 // pred_region
      _
    $region33: #{_ffn_core.1} parent=1 // pred_fallthru
      _
    // Predicated region
    $region34: #{_ffn_core.1} parent=1 // pred_check
      _
    $region35: #{_ffn_core.1} parent=1 // pred_check_branch
      %253 = sbr.rel (0) target = $region37
    $region36: #{_ffn_core.1} parent=1 // pred_region
      _
    $region37: #{_ffn_core.1} parent=1 // pred_fallthru
      _
    %254 = vsyncpa [#allocation3], 1
    %255 = vsyncpa [#allocation5], 1

</llo_original>
